<compile_context>
chip_gen: v7x
topology: tpu7x:2x2x1
jax: 0.10.0
libtpu: 0.0.40
codegen_flags: <defaults>
</compile_context>

<pallas_src>
import jax
import jax.numpy as jnp
from jax import lax
from jax.experimental import pallas as pl
from jax.experimental.pallas import tpu as pltpu


# --------------------------------------------------------------------------
# generation-aware knobs
# --------------------------------------------------------------------------
_VMEM_LIMIT = None


def _vmem_limit_bytes():
    """Scoped-VMEM limit: ~75% of physical VMEM, capped at 100 MiB."""
    global _VMEM_LIMIT
    if _VMEM_LIMIT is None:
        phys = 64 * 1024 * 1024                      # conservative default (v7x)
        try:
            phys = int(getattr(pltpu.get_tpu_info(), "vmem_capacity_bytes", phys))
        except Exception:
            pass
        _VMEM_LIMIT = max(32 * 1024 * 1024, min(phys * 3 // 4, 100 * 1024 * 1024))
    return _VMEM_LIMIT


def _compiler_params(semantics):
    return pltpu.CompilerParams(dimension_semantics=semantics,
                                vmem_limit_bytes=_vmem_limit_bytes())


# Measured HBM-roofline fraction vs lane-dim tile size (v6e, f32 elementwise).
_ROOFLINE_FRAC = {128: 0.29, 256: 0.63, 384: 0.75, 512: 0.85,
                  640: 0.85, 768: 0.86, 896: 0.86, 1024: 0.86}


def _nce0_tile(lp, bsz, ch, itemsize, n_streams):
    """Pick the time tile (multiple of 128) for nce0, or None -> full extent."""
    if lp < 128:
        return None
    # VMEM per tile column: double-buffered input streams + concat/f32 temps.
    per_col = bsz * ch * itemsize * (2 * n_streams + 1) + bsz * ch * 4 + 64
    budget_cols = max(128, (int(_vmem_limit_bytes() * 0.6) // per_col) // 128 * 128)
    cap = min(1024, budget_cols, (lp // 128) * 128)
    best, best_score = cap, -1.0
    for cand in range(128, cap + 1, 128):
        n_blk = pl.cdiv(lp, cand)
        eff = lp / (n_blk * cand)          # fraction of DMA'd columns that are valid
        score = eff * _ROOFLINE_FRAC.get(cand, 0.86)
        if n_blk >= 2:
            score *= 1.4                   # pipelining + 2-TensorCore headroom
        if score > best_score:
            best, best_score = cand, score
    return best


# --------------------------------------------------------------------------
# nce_type == 0 : per-time-step (B x B) similarities on the VPU
# --------------------------------------------------------------------------
def _make_nce0_kernel(bsz, tl, lp, n_l, n_inner, mode, rm):
    """mode selects how the t-shifted ht_ block is rebuilt from the inputs."""
    needs_mask = (lp % tl) != 0

    def kernel(*refs):
        o_ref = refs[-1]
        a_ref = refs[0]
        i_in = pl.program_id(1)
        g = pl.program_id(0) * n_inner + i_in        # global time-block index

        @pl.when(i_in == 0)
        def _init():
            o_ref[...] = jnp.zeros_like(o_ref)

        @pl.when(g < n_l)                            # tail guard for the 2-way split
        def _body():
            a = a_ref[...]                           # (B, C, TL) native dtype = ht block
            # Rebuild the t-shifted ht_ block (native dtype, static concat).
            if mode == "self":                       # single block covers everything
                ht_ = jnp.concatenate([a[:, :, rm:], a[:, :, :rm]], axis=-1)
            elif mode == "reuse":                    # src is pred, t < TL
                e0 = refs[1][...]
                ht_ = jnp.concatenate([a[:, :, rm:], e0[:, :, :rm]], axis=-1)
            elif mode == "single":                   # t is a multiple of TL
                ht_ = refs[1][...]
            elif mode == "wrap1":                    # src given, single block
                e0 = refs[1][...]
                ht_ = jnp.concatenate([e0[:, :, rm:], e0[:, :, :rm]], axis=-1)
            else:                                    # "pair": two shifted src blocks
                e0, e1 = refs[1][...], refs[2][...]
                ht_ = jnp.concatenate([e0[:, :, rm:], e1[:, :, :rm]], axis=-1)

            # rows[0, l] accumulates sum_i [ lse_l(i) - sim_l(i, i) ]
            rows = jnp.zeros((1, tl), jnp.float32)
            for i in range(bsz):                     # B is tiny -> unrolled
                prod = a[i:i + 1] * ht_              # (B, C, TL) VPU, native dtype
                sim = jnp.sum(prod.astype(jnp.float32), axis=1)    # (B, TL) f32
                m = jnp.max(sim, axis=0, keepdims=True)            # (1, TL)
                lse = jnp.log(jnp.sum(jnp.exp(sim - m), axis=0, keepdims=True)) + m
                rows = rows + (lse - sim[i:i + 1, :])
            if needs_mask:                           # mask columns beyond L'
                col = g * tl + lax.broadcasted_iota(jnp.int32, (1, tl), 1)
                rows = jnp.where(col < lp, rows, 0.0)
            # single cross-lane reduce per block
            o_ref[...] += jnp.sum(rows)

    return kernel


def _nce0_call(pred, src, t):
    bsz, ch, L = pred.shape
    lp = L - t
    if lp <= 0:
        raise ValueError("t must be smaller than the time length")
    same = src is None
    src_arr = pred if same else src
    if not same and src.shape != pred.shape:
        raise ValueError("src must have the same shape as pred")

    tl = _nce0_tile(lp, bsz, ch, pred.dtype.itemsize, 2 if same else 3)
    if tl is None:
        tl = L                                        # full-extent fallback (L' < 128)
    n_l = pl.cdiv(lp, tl)
    p_split = 2 if n_l >= 2 else 1                    # v7x: one output slot per TC
    n_inner = pl.cdiv(n_l, p_split)
    q, rm = divmod(t, tl)

    if tl >= L:                                       # only one block exists
        mode = "self" if same else "wrap1"
    elif same and q == 0:
        mode = "reuse"
    elif rm == 0:
        mode = "single"
    else:
        mode = "pair"

    max_blk_a = pl.cdiv(L, tl) - 1
    max_blk_s = pl.cdiv(src_arr.shape[-1], tl) - 1

    def _map(off, mx):
        # clamped block index: over-coverage / missing tail blocks are safe
        # because the kernel masks columns >= L' and skips steps with g >= n_l.
        return lambda p_, i_, off=off, mx=mx: (
            0, 0, jnp.minimum(p_ * n_inner + i_ + off, mx))

    in_specs = [pl.BlockSpec((bsz, ch, tl), _map(0, max_blk_a))]
    extra_arrays = []
    if mode in ("reuse",):
        in_specs.append(pl.BlockSpec((bsz, ch, tl), _map(1, max_blk_s)))
        extra_arrays = [src_arr]
    elif mode in ("single", "wrap1"):
        in_specs.append(pl.BlockSpec((bsz, ch, tl), _map(q, max_blk_s)))
        extra_arrays = [src_arr]
    elif mode == "pair":
        in_specs.append(pl.BlockSpec((bsz, ch, tl), _map(q, max_blk_s)))
        in_specs.append(pl.BlockSpec((bsz, ch, tl), _map(q + 1, max_blk_s)))
        extra_arrays = [src_arr, src_arr]

    kernel = _make_nce0_kernel(bsz, tl, lp, n_l, n_inner, mode, rm)
    out = pl.pallas_call(
        kernel,
        out_shape=jax.ShapeDtypeStruct((p_split, 1, 1), jnp.float32),
        grid_spec=pltpu.PrefetchScalarGridSpec(
            num_scalar_prefetch=0,
            grid=(p_split, n_inner),
            in_specs=in_specs,
            out_specs=pl.BlockSpec((1, 1, 1), lambda p_, i_: (p_, 0, 0)),
        ),
        compiler_params=_compiler_params(("parallel", "arbitrary")),
    )(pred, *extra_arrays)
    return jnp.sum(out) / (lp * bsz)


# --------------------------------------------------------------------------
# nce_type == 1 : row/column-tiled sim with online log-sum-exp (MXU)
# --------------------------------------------------------------------------
def _make_nce1_kernel(tr, lp, n_j):
    needs_mask = (lp % tr) != 0

    def kernel(t_ref, p_ref, o_ref, m_sc, l_sc):
        r = pl.program_id(1)
        j = pl.program_id(2)

        @pl.when(j == 0)
        def _init():
            o_ref[...] = jnp.zeros_like(o_ref)
            m_sc[...] = jnp.full_like(m_sc, -jnp.inf)
            l_sc[...] = jnp.zeros_like(l_sc)

        tgt = t_ref[0]                               # (C, TR) rows of sim (ht_)
        prd = p_ref[0]                               # (C, TR) cols of sim (ht)
        # Contract dim 0 of both operands so no in-kernel transpose is needed.
        sim = lax.dot_general(tgt, prd,
                              dimension_numbers=(((0,), (0,)), ((), ())),
                              preferred_element_type=jnp.float32)   # (TR, TR)
        if needs_mask:                               # columns beyond L' -> -inf
            col = j * tr + lax.broadcasted_iota(jnp.int32, sim.shape, 1)
            sim = jnp.where(col < lp, sim, -jnp.inf)

        # online (flash-style) log-sum-exp over the column blocks
        m_prev = m_sc[...]
        m_new = jnp.maximum(m_prev, jnp.max(sim, axis=-1, keepdims=True))
        l_sc[...] = (jnp.exp(m_prev - m_new) * l_sc[...]
                     + jnp.sum(jnp.exp(sim - m_new), axis=-1, keepdims=True))
        m_sc[...] = m_new

        if needs_mask:
            rowv = (r * tr + lax.broadcasted_iota(jnp.int32, (tr, 1), 0)) < lp
        else:
            rowv = None

        @pl.when(j == r)                             # diagonal (fz) lives in this block
        def _diag():
            eye = (lax.broadcasted_iota(jnp.int32, sim.shape, 0)
                   == lax.broadcasted_iota(jnp.int32, sim.shape, 1))
            fz = jnp.sum(jnp.where(eye, sim, 0.0), axis=-1, keepdims=True)  # (TR, 1)
            if rowv is not None:
                fz = jnp.where(rowv, fz, 0.0)
            o_ref[...] += -jnp.sum(fz)

        @pl.when(j == n_j - 1)                       # finalize this row block
        def _final():
            lse = m_sc[...] + jnp.log(l_sc[...])
            if rowv is not None:
                lse = jnp.where(rowv, lse, 0.0)
            o_ref[...] += jnp.sum(lse)

    return kernel


def _nce1_call(ht, ht_):
    bsz, ch, lp = ht.shape
    if lp < 128:
        tr = lp                                       # full-extent fallback (legal)
    elif lp < 512:
        tr = (lp // 128) * 128
    else:
        tr = 256                                      # bounds VMEM & feeds both TCs
    n_r = pl.cdiv(lp, tr)

    kernel = _make_nce1_kernel(tr, lp, n_r)
    out = pl.pallas_call(
        kernel,
        out_shape=jax.ShapeDtypeStruct((bsz * n_r, 1, 1), jnp.float32),
        grid_spec=pltpu.PrefetchScalarGridSpec(
            num_scalar_prefetch=0,
            grid=(bsz, n_r, n_r),
            in_specs=[
                pl.BlockSpec((1, ch, tr), lambda b, r, j: (b, 0, r)),   # rows (ht_)
                pl.BlockSpec((1, ch, tr), lambda b, r, j: (b, 0, j)),   # cols (ht)
            ],
            out_specs=pl.BlockSpec(
                (1, 1, 1), lambda b, r, j, n=n_r: (b * n + r, 0, 0)),
            scratch_shapes=[pltpu.VMEM((tr, 1), jnp.float32),           # running max
                            pltpu.VMEM((tr, 1), jnp.float32)],          # running sum
        ),
        compiler_params=_compiler_params(("parallel", "parallel", "arbitrary")),
    )(ht_, ht)
    return jnp.sum(out) / (bsz * lp)


# --------------------------------------------------------------------------
# public wrapper: CPC_NCE_Loss(t, nce_type).forward(pred, src)
# --------------------------------------------------------------------------
def cpc_nce_loss(pred, *, t, nce_type=0, src=None):
    if nce_type == 0:
        return _nce0_call(pred, src, t)
    elif nce_type == 1:
        # nce1 is compute (MXU/EUP) bound, so the wrapper-side shift slices are
        # a negligible fraction of its runtime; keep them for simplicity.
        ht = pred[..., :-t]
        ht_ = (src if src is not None else pred)[..., t:]
        return _nce1_call(ht, ht_)
    else:
        raise Exception(f"not valid type[{nce_type}]")


# --------------------------------------------------------------------------
# pure-JAX reference
# --------------------------------------------------------------------------
def _cpc_nce_loss_ref(pred, *, t, nce_type=0, src=None):
    ht = pred[..., :-t]
    ht_ = (src if src is not None else pred)[..., t:]
    if nce_type == 0:
        p = jnp.transpose(ht, (2, 0, 1))
        tg = jnp.transpose(ht_, (2, 1, 0))
        sim = p @ tg
    else:
        tg = jnp.swapaxes(ht_, -1, -2)
        sim = tg @ ht
    fz = jnp.diagonal(sim, 0, -2, -1)
    loss = jnp.log(jnp.sum(jnp.exp(sim - fz[..., None]), axis=-1))
    return jnp.mean(loss)


if __name__ == "__main__":
    key = jax.random.PRNGKey(0)
    ok = True
    configs = [
        # L' = 512: tiled path (TL/TR = 256), 2-way split, "reuse"/"pair" modes.
        dict(B=4, C=32, L=528, t=16, test_src=True),
        # L' = 12:  full-extent fallback ("self"/"wrap1" modes, masked columns).
        dict(B=2, C=16, L=16, t=4, test_src=True),
        # L' = 320: tiled path with masked tail blocks (nce0 and nce1).
        dict(B=2, C=16, L=330, t=10, test_src=False),
        # L' = 512, t = 256: shift is a whole number of blocks ("single" mode).
        dict(B=2, C=16, L=768, t=256, test_src=False),
    ]

    for cfg in configs:
        key, k1, k2 = jax.random.split(key, 3)
        shape = (cfg["B"], cfg["C"], cfg["L"])
        # Scale down so exp() stays well-conditioned in the (unstabilized)
        # reference; the kernels themselves are max-stabilized.
        pred = 0.1 * jax.random.normal(k1, shape, dtype=jnp.float32)
        src = 0.1 * jax.random.normal(k2, shape, dtype=jnp.float32)
        cases = [(0, None), (1, None)]
        if cfg["test_src"]:
            cases.append((0, src))       # src exercises the separate-source modes
        for nce_type, s in cases:
            out = jax.block_until_ready(
                cpc_nce_loss(pred, t=cfg["t"], nce_type=nce_type, src=s))
            ref = _cpc_nce_loss_ref(pred, t=cfg["t"], nce_type=nce_type, src=s)
            if not jnp.allclose(out, ref, rtol=1e-4, atol=1e-4):
                ok = False
                print(f"MISMATCH cfg={cfg} type={nce_type} "
                      f"src={'yes' if s is not None else 'no'}: "
                      f"kernel={out}, ref={ref}")

    if ok:
        print("KERNEL_OK")
</pallas_src>

<mosaic_0001>
module attributes {stable_mosaic.version = 11 : i64} {
  func.func @kernel(%arg0: i32, %arg1: i32, %arg2: memref<4x32x256xf32, #tpu.memory_space<vmem>>, %arg3: memref<4x32x256xf32, #tpu.memory_space<vmem>>, %arg4: memref<1x1x1xf32, #tpu.memory_space<vmem>>) attributes {dimension_semantics = [#tpu.dimension_semantics<parallel>, #tpu.dimension_semantics<arbitrary>], iteration_bounds = array<i64: 2, 1>, scalar_prefetch = 0 : i64, scratch_operands = 0 : i64, tpu.core_type = #tpu.core_type<tc>, window_params = [{transform_indices = @transform_0, window_bounds = array<i64: 4, 32, 256>}, {transform_indices = @transform_1, window_bounds = array<i64: 4, 32, 256>}, {transform_indices = @transform_2, window_bounds = array<i64: 1, 1, 1>}]} {
    %c1_i32 = arith.constant 1 : i32
    %0 = arith.muli %arg0, %c1_i32 : i32
    %1 = arith.addi %0, %arg1 : i32
    %c0_i32 = arith.constant 0 : i32
    %2 = arith.cmpi eq, %arg1, %c0_i32 : i32
    %3 = arith.extui %2 : i1 to i32
    %c0_i32_0 = arith.constant 0 : i32
    %4 = arith.cmpi ne, %3, %c0_i32_0 : i32
    scf.if %4 {
      %cst = arith.constant 0.000000e+00 : f32
      %8 = vector.broadcast %cst : f32 to vector<1x1x1xf32>
      %c0 = arith.constant 0 : index
      %c0_2 = arith.constant 0 : index
      %c0_3 = arith.constant 0 : index
      %9 = vector.load %arg4[%c0, %c0_2, %c0_3] : memref<1x1x1xf32, #tpu.memory_space<vmem>>, vector<1x1x1xf32>
      tpu.vector_store %arg4[%c0, %c0_2, %c0_3], %8 {strides = array<i32>} : memref<1x1x1xf32, #tpu.memory_space<vmem>>, vector<1x1x1xf32>,
    } else {
    }
    %c2_i32 = arith.constant 2 : i32
    %5 = arith.cmpi slt, %1, %c2_i32 : i32
    %6 = arith.extui %5 : i1 to i32
    %c0_i32_1 = arith.constant 0 : i32
    %7 = arith.cmpi ne, %6, %c0_i32_1 : i32
    scf.if %7 {
      %c0 = arith.constant 0 : index
      %c0_2 = arith.constant 0 : index
      %c0_3 = arith.constant 0 : index
      %8 = vector.load %arg2[%c0, %c0_2, %c0_3] : memref<4x32x256xf32, #tpu.memory_space<vmem>>, vector<4x32x256xf32>
      %c0_4 = arith.constant 0 : index
      %c0_5 = arith.constant 0 : index
      %c0_6 = arith.constant 0 : index
      %9 = vector.load %arg3[%c0_4, %c0_5, %c0_6] : memref<4x32x256xf32, #tpu.memory_space<vmem>>, vector<4x32x256xf32>
      %10 = vector.extract_strided_slice %8 {offsets = [0, 0, 16], sizes = [4, 32, 240], strides = [1, 1, 1]} : vector<4x32x256xf32> to vector<4x32x240xf32>
      %11 = vector.extract_strided_slice %9 {offsets = [0, 0, 0], sizes = [4, 32, 16], strides = [1, 1, 1]} : vector<4x32x256xf32> to vector<4x32x16xf32>
      %12 = tpu.concatenate %10, %11 in 2 : vector<4x32x240xf32>, vector<4x32x16xf32> -> vector<4x32x256xf32>
      %cst = arith.constant 0.000000e+00 : f32
      %13 = vector.broadcast %cst : f32 to vector<1x256xf32>
      %14 = vector.extract_strided_slice %8 {offsets = [0, 0, 0], sizes = [1, 32, 256], strides = [1, 1, 1]} : vector<4x32x256xf32> to vector<1x32x256xf32>
      %15 = vector.broadcast %14 : vector<1x32x256xf32> to vector<4x32x256xf32>
      %16 = arith.mulf %15, %12 : vector<4x32x256xf32>
      %cst_7 = arith.constant dense<0.000000e+00> : vector<4x256xf32>
      %17 = vector.multi_reduction <add>, %16, %cst_7 [1] : vector<4x32x256xf32> to vector<4x256xf32>
      %cst_8 = arith.constant dense<0xFF800000> : vector<256xf32>
      %18 = vector.multi_reduction <maximumf>, %17, %cst_8 [0] : vector<4x256xf32> to vector<256xf32>
      %19 = vector.shape_cast %18 : vector<256xf32> to vector<1x256xf32>
      %20 = vector.broadcast %19 : vector<1x256xf32> to vector<4x256xf32>
      %21 = arith.subf %17, %20 : vector<4x256xf32>
      %22 = math.exp %21 : vector<4x256xf32>
      %cst_9 = arith.constant dense<0.000000e+00> : vector<256xf32>
      %23 = vector.multi_reduction <add>, %22, %cst_9 [0] : vector<4x256xf32> to vector<256xf32>
      %24 = vector.shape_cast %23 : vector<256xf32> to vector<1x256xf32>
      %25 = math.log %24 : vector<1x256xf32>
      %26 = arith.addf %25, %19 : vector<1x256xf32>
      %27 = vector.extract_strided_slice %17 {offsets = [0, 0], sizes = [1, 256], strides = [1, 1]} : vector<4x256xf32> to vector<1x256xf32>
      %28 = arith.subf %26, %27 : vector<1x256xf32>
      %29 = arith.addf %13, %28 : vector<1x256xf32>
      %30 = vector.extract_strided_slice %8 {offsets = [1, 0, 0], sizes = [1, 32, 256], strides = [1, 1, 1]} : vector<4x32x256xf32> to vector<1x32x256xf32>
      %31 = vector.broadcast %30 : vector<1x32x256xf32> to vector<4x32x256xf32>
      %32 = arith.mulf %31, %12 : vector<4x32x256xf32>
      %cst_10 = arith.constant dense<0.000000e+00> : vector<4x256xf32>
      %33 = vector.multi_reduction <add>, %32, %cst_10 [1] : vector<4x32x256xf32> to vector<4x256xf32>
      %cst_11 = arith.constant dense<0xFF800000> : vector<256xf32>
      %34 = vector.multi_reduction <maximumf>, %33, %cst_11 [0] : vector<4x256xf32> to vector<256xf32>
      %35 = vector.shape_cast %34 : vector<256xf32> to vector<1x256xf32>
      %36 = vector.broadcast %35 : vector<1x256xf32> to vector<4x256xf32>
      %37 = arith.subf %33, %36 : vector<4x256xf32>
      %38 = math.exp %37 : vector<4x256xf32>
      %cst_12 = arith.constant dense<0.000000e+00> : vector<256xf32>
      %39 = vector.multi_reduction <add>, %38, %cst_12 [0] : vector<4x256xf32> to vector<256xf32>
      %40 = vector.shape_cast %39 : vector<256xf32> to vector<1x256xf32>
      %41 = math.log %40 : vector<1x256xf32>
      %42 = arith.addf %41, %35 : vector<1x256xf32>
      %43 = vector.extract_strided_slice %33 {offsets = [1, 0], sizes = [1, 256], strides = [1, 1]} : vector<4x256xf32> to vector<1x256xf32>
      %44 = arith.subf %42, %43 : vector<1x256xf32>
      %45 = arith.addf %29, %44 : vector<1x256xf32>
      %46 = vector.extract_strided_slice %8 {offsets = [2, 0, 0], sizes = [1, 32, 256], strides = [1, 1, 1]} : vector<4x32x256xf32> to vector<1x32x256xf32>
      %47 = vector.broadcast %46 : vector<1x32x256xf32> to vector<4x32x256xf32>
      %48 = arith.mulf %47, %12 : vector<4x32x256xf32>
      %cst_13 = arith.constant dense<0.000000e+00> : vector<4x256xf32>
      %49 = vector.multi_reduction <add>, %48, %cst_13 [1] : vector<4x32x256xf32> to vector<4x256xf32>
      %cst_14 = arith.constant dense<0xFF800000> : vector<256xf32>
      %50 = vector.multi_reduction <maximumf>, %49, %cst_14 [0] : vector<4x256xf32> to vector<256xf32>
      %51 = vector.shape_cast %50 : vector<256xf32> to vector<1x256xf32>
      %52 = vector.broadcast %51 : vector<1x256xf32> to vector<4x256xf32>
      %53 = arith.subf %49, %52 : vector<4x256xf32>
      %54 = math.exp %53 : vector<4x256xf32>
      %cst_15 = arith.constant dense<0.000000e+00> : vector<256xf32>
      %55 = vector.multi_reduction <add>, %54, %cst_15 [0] : vector<4x256xf32> to vector<256xf32>
      %56 = vector.shape_cast %55 : vector<256xf32> to vector<1x256xf32>
      %57 = math.log %56 : vector<1x256xf32>
      %58 = arith.addf %57, %51 : vector<1x256xf32>
      %59 = vector.extract_strided_slice %49 {offsets = [2, 0], sizes = [1, 256], strides = [1, 1]} : vector<4x256xf32> to vector<1x256xf32>
      %60 = arith.subf %58, %59 : vector<1x256xf32>
      %61 = arith.addf %45, %60 : vector<1x256xf32>
      %62 = vector.extract_strided_slice %8 {offsets = [3, 0, 0], sizes = [1, 32, 256], strides = [1, 1, 1]} : vector<4x32x256xf32> to vector<1x32x256xf32>
      %63 = vector.broadcast %62 : vector<1x32x256xf32> to vector<4x32x256xf32>
      %64 = arith.mulf %63, %12 : vector<4x32x256xf32>
      %cst_16 = arith.constant dense<0.000000e+00> : vector<4x256xf32>
      %65 = vector.multi_reduction <add>, %64, %cst_16 [1] : vector<4x32x256xf32> to vector<4x256xf32>
      %cst_17 = arith.constant dense<0xFF800000> : vector<256xf32>
      %66 = vector.multi_reduction <maximumf>, %65, %cst_17 [0] : vector<4x256xf32> to vector<256xf32>
      %67 = vector.shape_cast %66 : vector<256xf32> to vector<1x256xf32>
      %68 = vector.broadcast %67 : vector<1x256xf32> to vector<4x256xf32>
      %69 = arith.subf %65, %68 : vector<4x256xf32>
      %70 = math.exp %69 : vector<4x256xf32>
      %cst_18 = arith.constant dense<0.000000e+00> : vector<256xf32>
      %71 = vector.multi_reduction <add>, %70, %cst_18 [0] : vector<4x256xf32> to vector<256xf32>
      %72 = vector.shape_cast %71 : vector<256xf32> to vector<1x256xf32>
      %73 = math.log %72 : vector<1x256xf32>
      %74 = arith.addf %73, %67 : vector<1x256xf32>
      %75 = vector.extract_strided_slice %65 {offsets = [3, 0], sizes = [1, 256], strides = [1, 1]} : vector<4x256xf32> to vector<1x256xf32>
      %76 = arith.subf %74, %75 : vector<1x256xf32>
      %77 = arith.addf %61, %76 : vector<1x256xf32>
      %c0_19 = arith.constant 0 : index
      %c0_20 = arith.constant 0 : index
      %c0_21 = arith.constant 0 : index
      %78 = vector.load %arg4[%c0_19, %c0_20, %c0_21] : memref<1x1x1xf32, #tpu.memory_space<vmem>>, vector<1x1x1xf32>
      %79 = vector.shape_cast %77 : vector<1x256xf32> to vector<1x1x256xf32>
      %cst_22 = arith.constant dense<0.000000e+00> : vector<1xf32>
      %80 = vector.multi_reduction <add>, %79, %cst_22 [1, 2] : vector<1x1x256xf32> to vector<1xf32>
      %81 = vector.shape_cast %80 : vector<1xf32> to vector<1x1x1xf32>
      %82 = vector.extract %81[0, 0, 0] : f32 from vector<1x1x1xf32>
      %83 = vector.broadcast %82 : f32 to vector<1x1x1xf32>
      %84 = arith.addf %78, %83 : vector<1x1x1xf32>
      %c0_23 = arith.constant 0 : index
      %c0_24 = arith.constant 0 : index
      %c0_25 = arith.constant 0 : index
      %85 = vector.load %arg4[%c0_23, %c0_24, %c0_25] : memref<1x1x1xf32, #tpu.memory_space<vmem>>, vector<1x1x1xf32>
      tpu.vector_store %arg4[%c0_23, %c0_24, %c0_25], %84 {strides = array<i32>} : memref<1x1x1xf32, #tpu.memory_space<vmem>>, vector<1x1x1xf32>,
    } else {
    }
    return
  }
  func.func @transform_0(%arg0: i32, %arg1: i32) -> (i32, i32, i32) {
    %c1_i32 = arith.constant 1 : i32
    %0 = arith.muli %arg0, %c1_i32 : i32
    %1 = arith.addi %0, %arg1 : i32
    %c0_i32 = arith.constant 0 : i32
    %2 = arith.addi %1, %c0_i32 : i32
    %c2_i32 = arith.constant 2 : i32
    %3 = arith.minsi %2, %c2_i32 : i32
    %c0_i32_0 = arith.constant 0 : i32
    %c0_i32_1 = arith.constant 0 : i32
    %c0_i32_2 = arith.constant 0 : i32
    return %c0_i32_0, %c0_i32_1, %3 : i32, i32, i32
  }
  func.func @transform_1(%arg0: i32, %arg1: i32) -> (i32, i32, i32) {
    %c1_i32 = arith.constant 1 : i32
    %0 = arith.muli %arg0, %c1_i32 : i32
    %1 = arith.addi %0, %arg1 : i32
    %c1_i32_0 = arith.constant 1 : i32
    %2 = arith.addi %1, %c1_i32_0 : i32
    %c2_i32 = arith.constant 2 : i32
    %3 = arith.minsi %2, %c2_i32 : i32
    %c0_i32 = arith.constant 0 : i32
    %c0_i32_1 = arith.constant 0 : i32
    %c0_i32_2 = arith.constant 0 : i32
    return %c0_i32, %c0_i32_1, %3 : i32, i32, i32
  }
  func.func @transform_2(%arg0: i32, %arg1: i32) -> (i32, i32, i32) {
    %c0_i32 = arith.constant 0 : i32
    %c0_i32_0 = arith.constant 0 : i32
    %c0_i32_1 = arith.constant 0 : i32
    return %arg0, %c0_i32, %c0_i32_0 : i32, i32, i32
  }
}

</mosaic_0001>

<llo_original>
// kernel: tpu_custom_call.1
$region0: #{tpu_custom_call.1}
  #allocation0 [shape = 'u32[]', space=smem, size = 0x4, offset = 0x4, fixed_abs, tag = 'smem constant byte address 0x4 - core index']
  #allocation1 [shape = 'u32[144,128]{1,0:T(1,128)}', space=vmem, size = 0x12000, scoped, tag = 'internal scratch']
  %s0 = inlined_call_operand.hbm [shape: f32[4,32,528], index: 0, kind: input, shape index: {}]
  %s1 = inlined_call_operand.hbm [shape: f32[4,32,528], index: 1, kind: input, shape index: {}]
  %s2 = inlined_call_operand.vmem [shape: f32[2,1,1], index: 2, kind: output, shape index: {}]
  %s3 = sld [smem:[#allocation0]]
  $region57: #{tpu_custom_call.1} parent=0
    _
  %s5 = ssub.s32 1, %s3
  %s6 = scalar_select 0, %s5, %s3
  $region1: #{tpu_custom_call.1} parent=0
    #allocation2 [shape = 'u8[262144]{0}', space=vmem, size = 0x40000, scoped, tag = 'input window, operand 0']
    #allocation3 [shape = 's32[2]{0}', space=sflag, size = 0x8, scoped, tag = 'scoped memory for tpu_custom_call.1']
    #allocation4 [shape = 'u8[262144]{0}', space=vmem, size = 0x40000, scoped, tag = 'input window, operand 1']
    #allocation5 [shape = 's32[2]{0}', space=sflag, size = 0x8, scoped, tag = 'scoped memory for tpu_custom_call.1']
    %7 = vsyncpa [#allocation3], 0
    %s8 = scalar_lea.sflag [#allocation3], 1
    %9 = vsyncpa %s8, 0
    %10 = vsyncpa [#allocation5], 0
    %s11 = scalar_lea.sflag [#allocation5], 1
    %12 = vsyncpa %s11, 0
    loop: start=0, step=1, limit=4
    $region2: #{tpu_custom_call.1} parent=1 // loop_pre_header
      _
    $region3: #{tpu_custom_call.1} parent=1 // loop_header
      %s14 = sphi 0, %s18
      %p15 = scmp.ge.s32.totalorder %s14, 4
      %s21 = sphi 0, %s33
      %s22 = sphi 0, %s29
      %s23 = sphi 0, %s21
      %s24 = sphi 0, %s22
      %s25 = sphi 0, %s23
      %s26 = sphi 0, %s24
      %s42 = sphi 0, %s44
      %s45 = sphi 0, %s42
      %s46 = sphi 0, %s45
      %s62 = sphi 0, %s46
      %s76 = sphi 0, %s78
      %s79 = sphi 0, %s76
      %s80 = sphi 0, %s79
      %s96 = sphi 0, %s80
      %s102 = sphi 0, %s104
      %s105 = sphi 0, %s102
      %s106 = sphi 0, %s105
      %s122 = sphi 0, %s106
    $region4: #{tpu_custom_call.1} parent=1 // loop_header_branch
      %17 = sbr.rel (%p15) target = $region8
    $region5: #{tpu_custom_call.1} parent=1 // loop_body
      %s19 = ssub.s32 %s14, 1
      %s20 = ssub.s32 %s14, 2
      %s27 = sadd.s32 1, %s22
      %p28 = scmp.ge.s32.totalorder %s27, 1
      %s29 = scalar_select %p28, 0, %s27
      %s30 = sadd.s32 1, %s21
      %s31 = scalar_select %p28, %s30, %s21
      %p32 = scmp.ge.s32.totalorder %s31, 2
      %s33 = scalar_select %p32, 0, %s31
      %s34 = sadd.s32 %s21, %s22
      %p35 = scmp.lt.s32.totalorder %s34, 2
      %s36 = scalar_select %p35, %s34, 2
      %s37 = sadd.s32 %s33, %s29
      %p38 = scmp.lt.s32.totalorder %s37, 2
      %s39 = scalar_select %p38, %s37, 2
      %s40 = ssub.s32 %s36, %s39
      %p41 = scmp.eq.s32.totalorder %s40, 0
      %s43 = sadd.s32 %s42, 1
      %s44 = scalar_select %p41, %s42, %s43
      %p47 = pneg %p41
      %p48 = scmp.eq.s32.totalorder %s14, 1
      %p49 = por %p47, %p48
      %p50 = scmp.ne.s32.totalorder %s42, %s45
      %p51 = scmp.eq.s32.totalorder %s14, 0
      %p52 = por %p50, %p51
      %p53 = scmp.ne.s32.totalorder %s42, %s45
      %p54 = scmp.eq.s32.totalorder %s19, 1
      %p55 = por %p53, %p54
      %p56 = scmp.ne.s32.totalorder %s45, %s46
      %p57 = scmp.eq.s32.totalorder %s19, 0
      %p58 = por %p56, %p57
      %p59 = scmp.ne.s32.totalorder %s45, %s46
      %p60 = scmp.eq.s32.totalorder %s20, 1
      %p61 = por %p59, %p60
      %p63 = scmp.ne.s32.totalorder %s46, %s62
      %p64 = scmp.eq.s32.totalorder %s20, 0
      %p65 = por %p63, %p64
      %s66 = sadd.s32 %s21, %s22
      %s67 = sadd.s32 %s66, 1
      %p68 = scmp.lt.s32.totalorder %s67, 2
      %s69 = scalar_select %p68, %s67, 2
      %s70 = sadd.s32 %s33, %s29
      %s71 = sadd.s32 %s70, 1
      %p72 = scmp.lt.s32.totalorder %s71, 2
      %s73 = scalar_select %p72, %s71, 2
      %s74 = ssub.s32 %s69, %s73
      %p75 = scmp.eq.s32.totalorder %s74, 0
      %s77 = sadd.s32 %s76, 1
      %s78 = scalar_select %p75, %s76, %s77
      %p81 = pneg %p75
      %p82 = scmp.eq.s32.totalorder %s14, 1
      %p83 = por %p81, %p82
      %p84 = scmp.ne.s32.totalorder %s76, %s79
      %p85 = scmp.eq.s32.totalorder %s14, 0
      %p86 = por %p84, %p85
      %p87 = scmp.ne.s32.totalorder %s76, %s79
      %p88 = scmp.eq.s32.totalorder %s19, 1
      %p89 = por %p87, %p88
      %p90 = scmp.ne.s32.totalorder %s79, %s80
      %p91 = scmp.eq.s32.totalorder %s19, 0
      %p92 = por %p90, %p91
      %p93 = scmp.ne.s32.totalorder %s79, %s80
      %p94 = scmp.eq.s32.totalorder %s20, 1
      %p95 = por %p93, %p94
      %p97 = scmp.ne.s32.totalorder %s80, %s96
      %p98 = scmp.eq.s32.totalorder %s20, 0
      %p99 = por %p97, %p98
      %s100 = ssub.s32 %s21, %s33
      %p101 = scmp.eq.s32.totalorder %s100, 0
      %s103 = sadd.s32 %s102, 1
      %s104 = scalar_select %p101, %s102, %s103
      %p107 = pneg %p101
      %p108 = scmp.eq.s32.totalorder %s14, 1
      %p109 = por %p107, %p108
      %p110 = scmp.ne.s32.totalorder %s102, %s105
      %p111 = scmp.eq.s32.totalorder %s14, 0
      %p112 = por %p110, %p111
      %p113 = scmp.ne.s32.totalorder %s102, %s105
      %p114 = scmp.eq.s32.totalorder %s19, 1
      %p115 = por %p113, %p114
      %p116 = scmp.ne.s32.totalorder %s105, %s106
      %p117 = scmp.eq.s32.totalorder %s19, 0
      %p118 = por %p116, %p117
      %p119 = scmp.ne.s32.totalorder %s105, %s106
      %p120 = scmp.eq.s32.totalorder %s20, 1
      %p121 = por %p119, %p120
      %p123 = scmp.ne.s32.totalorder %s106, %s122
      %p124 = scmp.eq.s32.totalorder %s20, 0
      %p125 = por %p123, %p124
      %p126 = scmp.le.s32.totalorder 1, %s14
      %p127 = scmp.lt.s32.totalorder %s14, 3
      %p128 = pnand %p126, %p127
      %p129 = pneg %p128
      // Predicated region
      $region9: #{tpu_custom_call.1} parent=5 // pred_check
        _
      $region10: #{tpu_custom_call.1} parent=5 // pred_check_branch
        %131 = sbr.rel (%p128) target = $region12
      $region11: #{tpu_custom_call.1} parent=5 // pred_region
        %s132 = ssub.s32 %s14, 1
      $region12: #{tpu_custom_call.1} parent=5 // pred_fallthru
        _
      %p133 = scmp.lt.s32.totalorder %s14, 2
      // Predicated region
      $region13: #{tpu_custom_call.1} parent=5 // pred_check
        %p134 = pneg %p133
      $region14: #{tpu_custom_call.1} parent=5 // pred_check_branch
        %136 = sbr.rel (%p134) target = $region16
      $region15: #{tpu_custom_call.1} parent=5 // pred_region
        // Predicated region
        $region17: #{tpu_custom_call.1} parent=15 // pred_check
          %p137 = pneg %p52
        $region18: #{tpu_custom_call.1} parent=15 // pred_check_branch
          %139 = sbr.rel (%p137) target = $region20
        $region19: #{tpu_custom_call.1} parent=15 // pred_region
          %s140 = sand.u32 %s42, 1
          %s141 = scalar_lea.sflag [#allocation3], %s140
          %s142 = sand.u32 %s42, 1
          %s143 = smul.addr %s142, 256
          %s144 = scalar_lea.vmem [#allocation2], %s143
          %s145 = sadd.s32 %s21, %s22
          %p146 = scmp.lt.s32.totalorder %s145, 2
          %s147 = scalar_select %p146, %s145, 2
          %s148 = smul.u32 2, %s147
          %s149 = ssub.s32 5, %s148
          %p150 = scmp.lt.s32.totalorder %s149, 2
          %s151 = scalar_select %p150, %s149, 2
          %s152 = smul.u32 2048, %s151
          %s154 = ssub.s32 4096, %s152
          %155 = vsyncadd %s141, %s154
          %p156 = scmp.ne.s32.totalorder 0, %s152
          %s157 = smul.addr %s148, 128
          %s158 = scalar_lea.hbm %s0, %s157
          %s159 = smul.u32 %s151, 8
          %s160 = smul.u32 %s159, 16
          %s161 = sshll.u32 %s144, 4
          %s162 = int_to_ptr.vmem [resolvable:$true] %s161
          %s163 = sshll.u32 %s160, 4
          %167 = dma.hbm_to_vmem [thread:$0]  (%p156), %s158, %s163, %s162, %s141, 640, 256, %s159
        $region20: #{tpu_custom_call.1} parent=15 // pred_fallthru
          _
        // Predicated region
        $region21: #{tpu_custom_call.1} parent=15 // pred_check
          %p168 = pneg %p86
        $region22: #{tpu_custom_call.1} parent=15 // pred_check_branch
          %170 = sbr.rel (%p168) target = $region24
        $region23: #{tpu_custom_call.1} parent=15 // pred_region
          %s171 = sand.u32 %s76, 1
          %s172 = scalar_lea.sflag [#allocation5], %s171
          %s173 = sand.u32 %s76, 1
          %s174 = smul.addr %s173, 256
          %s175 = scalar_lea.vmem [#allocation4], %s174
          %s176 = sadd.s32 %s21, %s22
          %s177 = sadd.s32 %s176, 1
          %p178 = scmp.lt.s32.totalorder %s177, 2
          %s179 = scalar_select %p178, %s177, 2
          %s180 = smul.u32 2, %s179
          %s181 = ssub.s32 5, %s180
          %p182 = scmp.lt.s32.totalorder %s181, 2
          %s183 = scalar_select %p182, %s181, 2
          %s184 = smul.u32 2048, %s183
          %s186 = ssub.s32 4096, %s184
          %187 = vsyncadd %s172, %s186
          %p188 = scmp.ne.s32.totalorder 0, %s184
          %s189 = smul.addr %s180, 128
          %s190 = scalar_lea.hbm %s1, %s189
          %s191 = smul.u32 %s183, 8
          %s192 = smul.u32 %s191, 16
          %s193 = sshll.u32 %s175, 4
          %s194 = int_to_ptr.vmem [resolvable:$true] %s193
          %s195 = sshll.u32 %s192, 4
          %199 = dma.hbm_to_vmem [thread:$0]  (%p188), %s190, %s195, %s194, %s172, 640, 256, %s191
        $region24: #{tpu_custom_call.1} parent=15 // pred_fallthru
          _
      $region16: #{tpu_custom_call.1} parent=5 // pred_fallthru
        _
      %p200 = scmp.le.s32.totalorder 1, %s14
      %p201 = scmp.lt.s32.totalorder %s14, 3
      %p202 = pnand %p200, %p201
      %p203 = pneg %p202
      // Predicated region
      $region25: #{tpu_custom_call.1} parent=5 // pred_check
        _
      $region26: #{tpu_custom_call.1} parent=5 // pred_check_branch
        %205 = sbr.rel (%p202) target = $region28
      $region27: #{tpu_custom_call.1} parent=5 // pred_region
        %s206 = ssub.s32 %s14, 1
        %s207 = sand.u32 %s45, 1
        %s208 = scalar_lea.sflag [#allocation3], %s207
        %s209 = sand.u32 %s45, 1
        %s210 = smul.addr %s209, 256
        %s211 = scalar_lea.vmem [#allocation2], %s210
        // Predicated region
        $region29: #{tpu_custom_call.1} parent=27 // pred_check
          %p212 = pneg %p58
        $region30: #{tpu_custom_call.1} parent=27 // pred_check_branch
          %214 = sbr.rel (%p212) target = $region32
        $region31: #{tpu_custom_call.1} parent=27 // pred_region
          %215 = dma.done %s208, 4096
        $region32: #{tpu_custom_call.1} parent=27 // pred_fallthru
          _
        %s216 = sand.u32 %s79, 1
        %s217 = scalar_lea.sflag [#allocation5], %s216
        %s218 = sand.u32 %s79, 1
        %s219 = smul.addr %s218, 256
        %s220 = scalar_lea.vmem [#allocation4], %s219
        // Predicated region
        $region33: #{tpu_custom_call.1} parent=27 // pred_check
          %p221 = pneg %p92
        $region34: #{tpu_custom_call.1} parent=27 // pred_check_branch
          %223 = sbr.rel (%p221) target = $region36
        $region35: #{tpu_custom_call.1} parent=27 // pred_region
          %224 = dma.done %s217, 4096
        $region36: #{tpu_custom_call.1} parent=27 // pred_fallthru
          _
        %s225 = sand.u32 %s45, 1
        %s226 = scalar_lea.sflag [#allocation3], %s225
        %s227 = sand.u32 %s45, 1
        %s228 = smul.addr %s227, 256
        %s229 = scalar_lea.vmem [#allocation2], %s228
        %p230 = pneg %p58
        %p231 = pneg %p55
        %s232 = sand.u32 %s79, 1
        %s233 = scalar_lea.sflag [#allocation5], %s232
        %s234 = sand.u32 %s79, 1
        %s235 = smul.addr %s234, 256
        %s236 = scalar_lea.vmem [#allocation4], %s235
        %p237 = pneg %p92
        %p238 = pneg %p89
        %p239 = pneg %p118
        %p240 = pneg %p115
        %p241 = scmp.lt.s32.totalorder %s23, 1
        %s242 = scalar_select %p241, %s23, 1
        %s243 = scalar_lea.vmem %s2, %s242
        %s244 = sadd.s32 %s23, %s24
        %p245 = scmp.lt.s32.totalorder %s244, 2
        %s246 = scalar_select %p245, %s244, 2
        %s247 = smul.u32 2, %s246
        %s248 = ssub.s32 5, %s247
        %p249 = scmp.lt.s32.totalorder %s248, 2
        %s250 = scalar_select %p249, %s248, 2
        %s251 = smul.u32 2048, %s250
        %s252 = sadd.s32 %s23, %s24
        %s253 = sadd.s32 %s252, 1
        %p254 = scmp.lt.s32.totalorder %s253, 2
        %s255 = scalar_select %p254, %s253, 2
        %s256 = smul.u32 2, %s255
        %s257 = ssub.s32 5, %s256
        %p258 = scmp.lt.s32.totalorder %s257, 2
        %s259 = scalar_select %p258, %s257, 2
        %s260 = smul.u32 2048, %s259
        %p261 = scmp.lt.s32.totalorder %s23, 1
        %s262 = scalar_select %p261, %s23, 1
        %s263 = scalar_lea.vmem %s2, %s262
        %s264 = sadd.s32 %s23, %s24
        %p265 = scmp.eq.s32.totalorder %s24, 0
        // Predicated region
        $region37: #{tpu_custom_call.1} parent=27 // pred_check
          %p266 = pneg %p265
        $region38: #{tpu_custom_call.1} parent=27 // pred_check_branch
          %268 = sbr.rel (%p266) target = $region40
        $region39: #{tpu_custom_call.1} parent=27 // pred_region
          %vm269 = vcmask 0
          %270 = vst.msk [vmem:[%s263] sm:$0x1] %vm269, 0.0
        $region40: #{tpu_custom_call.1} parent=27 // pred_fallthru
          _
        %p271 = scmp.lt.s32.totalorder %s264, 2
        // Predicated region
        $region41: #{tpu_custom_call.1} parent=27 // pred_check
          %p272 = pneg %p271
        $region42: #{tpu_custom_call.1} parent=27 // pred_check_branch
          %274 = sbr.rel (%p272) target = $region44
        $region43: #{tpu_custom_call.1} parent=27 // pred_region
          %v275 = vld [vmem:[%s211] sm:$0xff]
          %v276 = vld [vmem:[%s211 + $0x8] sm:$0xff]
          %v277 = vld [vmem:[%s211 + $0x10] sm:$0xff]
          %v278 = vld [vmem:[%s211 + $0x18] sm:$0xff]
          %v279 = vld [vmem:[%s211 + $0x20] sm:$0xff]
          %v280 = vld [vmem:[%s211 + $0x28] sm:$0xff]
          %v281 = vld [vmem:[%s211 + $0x30] sm:$0xff]
          %v282 = vld [vmem:[%s211 + $0x38] sm:$0xff]
          %v283 = vld [vmem:[%s211 + $0x40] sm:$0xff]
          %v284 = vld [vmem:[%s211 + $0x48] sm:$0xff]
          %v285 = vld [vmem:[%s211 + $0x50] sm:$0xff]
          %v286 = vld [vmem:[%s211 + $0x58] sm:$0xff]
          %v287 = vld [vmem:[%s211 + $0x60] sm:$0xff]
          %v288 = vld [vmem:[%s211 + $0x68] sm:$0xff]
          %v289 = vld [vmem:[%s211 + $0x70] sm:$0xff]
          %v290 = vld [vmem:[%s211 + $0x78] sm:$0xff]
          %v291 = vld [vmem:[%s211 + $0x80] sm:$0xff]
          %v292 = vld [vmem:[%s211 + $0x88] sm:$0xff]
          %v293 = vld [vmem:[%s211 + $0x90] sm:$0xff]
          %v294 = vld [vmem:[%s211 + $0x98] sm:$0xff]
          %v295 = vld [vmem:[%s211 + $0xa0] sm:$0xff]
          %v296 = vld [vmem:[%s211 + $0xa8] sm:$0xff]
          %v297 = vld [vmem:[%s211 + $0xb0] sm:$0xff]
          %v298 = vld [vmem:[%s211 + $0xb8] sm:$0xff]
          %v299 = vld [vmem:[%s211 + $0xc0] sm:$0xff]
          %v300 = vld [vmem:[%s211 + $0xc8] sm:$0xff]
          %v301 = vld [vmem:[%s211 + $0xd0] sm:$0xff]
          %v302 = vld [vmem:[%s211 + $0xd8] sm:$0xff]
          %v303 = vld [vmem:[%s211 + $0xe0] sm:$0xff]
          %v304 = vld [vmem:[%s211 + $0xe8] sm:$0xff]
          %v305 = vld [vmem:[%s211 + $0xf0] sm:$0xff]
          %v306 = vld [vmem:[%s211 + $0xf8] sm:$0xff]
          %v307 = vld [vmem:[%s220] sm:$0xff]
          %v308 = vld [vmem:[%s220 + $0x10] sm:$0xff]
          %v309 = vld [vmem:[%s220 + $0x20] sm:$0xff]
          %v310 = vld [vmem:[%s220 + $0x30] sm:$0xff]
          %v311 = vld [vmem:[%s220 + $0x40] sm:$0xff]
          %v312 = vld [vmem:[%s220 + $0x50] sm:$0xff]
          %v313 = vld [vmem:[%s220 + $0x60] sm:$0xff]
          %v314 = vld [vmem:[%s220 + $0x70] sm:$0xff]
          %v315 = vld [vmem:[%s220 + $0x80] sm:$0xff]
          %v316 = vld [vmem:[%s220 + $0x90] sm:$0xff]
          %v317 = vld [vmem:[%s220 + $0xa0] sm:$0xff]
          %v318 = vld [vmem:[%s220 + $0xb0] sm:$0xff]
          %v319 = vld [vmem:[%s220 + $0xc0] sm:$0xff]
          %v320 = vld [vmem:[%s220 + $0xd0] sm:$0xff]
          %v321 = vld [vmem:[%s220 + $0xe0] sm:$0xff]
          %v322 = vld [vmem:[%s220 + $0xf0] sm:$0xff]
          %355 = vrot.lane.b32.xlu0 %v275, 112
          %v356 = vpop.permute.xlu0 %355
          %357 = vrot.lane.b32.xlu0 %v276, 112
          %v358 = vpop.permute.xlu0 %357
          %359 = vrot.lane.b32.xlu0 %v277, 112
          %v360 = vpop.permute.xlu0 %359
          %361 = vrot.lane.b32.xlu0 %v278, 112
          %v362 = vpop.permute.xlu0 %361
          %363 = vrot.lane.b32.xlu0 %v279, 112
          %v364 = vpop.permute.xlu0 %363
          %365 = vrot.lane.b32.xlu0 %v280, 112
          %v366 = vpop.permute.xlu0 %365
          %367 = vrot.lane.b32.xlu0 %v281, 112
          %v368 = vpop.permute.xlu0 %367
          %369 = vrot.lane.b32.xlu0 %v282, 112
          %v370 = vpop.permute.xlu0 %369
          %371 = vrot.lane.b32.xlu0 %v283, 112
          %v372 = vpop.permute.xlu0 %371
          %373 = vrot.lane.b32.xlu0 %v284, 112
          %v374 = vpop.permute.xlu0 %373
          %375 = vrot.lane.b32.xlu0 %v285, 112
          %v376 = vpop.permute.xlu0 %375
          %377 = vrot.lane.b32.xlu0 %v286, 112
          %v378 = vpop.permute.xlu0 %377
          %379 = vrot.lane.b32.xlu0 %v287, 112
          %v380 = vpop.permute.xlu0 %379
          %381 = vrot.lane.b32.xlu0 %v288, 112
          %v382 = vpop.permute.xlu0 %381
          %383 = vrot.lane.b32.xlu0 %v289, 112
          %v384 = vpop.permute.xlu0 %383
          %385 = vrot.lane.b32.xlu0 %v290, 112
          %v386 = vpop.permute.xlu0 %385
          %387 = vrot.lane.b32.xlu0 %v291, 112
          %v388 = vpop.permute.xlu0 %387
          %389 = vrot.lane.b32.xlu0 %v292, 112
          %v390 = vpop.permute.xlu0 %389
          %391 = vrot.lane.b32.xlu0 %v293, 112
          %v392 = vpop.permute.xlu0 %391
          %393 = vrot.lane.b32.xlu0 %v294, 112
          %v394 = vpop.permute.xlu0 %393
          %395 = vrot.lane.b32.xlu0 %v295, 112
          %v396 = vpop.permute.xlu0 %395
          %397 = vrot.lane.b32.xlu0 %v296, 112
          %v398 = vpop.permute.xlu0 %397
          %399 = vrot.lane.b32.xlu0 %v297, 112
          %v400 = vpop.permute.xlu0 %399
          %401 = vrot.lane.b32.xlu0 %v298, 112
          %v402 = vpop.permute.xlu0 %401
          %403 = vrot.lane.b32.xlu0 %v299, 112
          %v404 = vpop.permute.xlu0 %403
          %405 = vrot.lane.b32.xlu0 %v300, 112
          %v406 = vpop.permute.xlu0 %405
          %407 = vrot.lane.b32.xlu0 %v301, 112
          %v408 = vpop.permute.xlu0 %407
          %409 = vrot.lane.b32.xlu0 %v302, 112
          %v410 = vpop.permute.xlu0 %409
          %411 = vrot.lane.b32.xlu0 %v303, 112
          %v412 = vpop.permute.xlu0 %411
          %413 = vrot.lane.b32.xlu0 %v304, 112
          %v414 = vpop.permute.xlu0 %413
          %415 = vrot.lane.b32.xlu0 %v305, 112
          %v416 = vpop.permute.xlu0 %415
          %417 = vrot.lane.b32.xlu0 %v306, 112
          %v418 = vpop.permute.xlu0 %417
          %vm419 = vcmask 916480
          %v420 = vsel %vm419, %v356, %v358
          %v421 = vsel %vm419, %v360, %v362
          %v422 = vsel %vm419, %v364, %v366
          %v423 = vsel %vm419, %v368, %v370
          %v424 = vsel %vm419, %v372, %v374
          %v425 = vsel %vm419, %v376, %v378
          %v426 = vsel %vm419, %v380, %v382
          %v427 = vsel %vm419, %v384, %v386
          %v428 = vsel %vm419, %v388, %v390
          %v429 = vsel %vm419, %v392, %v394
          %v430 = vsel %vm419, %v396, %v398
          %v431 = vsel %vm419, %v400, %v402
          %v432 = vsel %vm419, %v404, %v406
          %v433 = vsel %vm419, %v408, %v410
          %v434 = vsel %vm419, %v412, %v414
          %v435 = vsel %vm419, %v416, %v418
          %484 = vrot.lane.b32.xlu0 %v307, 112
          %v485 = vpop.permute.xlu0 %484
          %486 = vrot.lane.b32.xlu0 %v308, 112
          %v487 = vpop.permute.xlu0 %486
          %488 = vrot.lane.b32.xlu0 %v309, 112
          %v489 = vpop.permute.xlu0 %488
          %490 = vrot.lane.b32.xlu0 %v310, 112
          %v491 = vpop.permute.xlu0 %490
          %492 = vrot.lane.b32.xlu0 %v311, 112
          %v493 = vpop.permute.xlu0 %492
          %494 = vrot.lane.b32.xlu0 %v312, 112
          %v495 = vpop.permute.xlu0 %494
          %496 = vrot.lane.b32.xlu0 %v313, 112
          %v497 = vpop.permute.xlu0 %496
          %498 = vrot.lane.b32.xlu0 %v314, 112
          %v499 = vpop.permute.xlu0 %498
          %500 = vrot.lane.b32.xlu0 %v315, 112
          %v501 = vpop.permute.xlu0 %500
          %502 = vrot.lane.b32.xlu0 %v316, 112
          %v503 = vpop.permute.xlu0 %502
          %504 = vrot.lane.b32.xlu0 %v317, 112
          %v505 = vpop.permute.xlu0 %504
          %506 = vrot.lane.b32.xlu0 %v318, 112
          %v507 = vpop.permute.xlu0 %506
          %508 = vrot.lane.b32.xlu0 %v319, 112
          %v509 = vpop.permute.xlu0 %508
          %510 = vrot.lane.b32.xlu0 %v320, 112
          %v511 = vpop.permute.xlu0 %510
          %512 = vrot.lane.b32.xlu0 %v321, 112
          %v513 = vpop.permute.xlu0 %512
          %514 = vrot.lane.b32.xlu0 %v322, 112
          %v515 = vpop.permute.xlu0 %514
          %v532 = vsel %vm419, %v358, %v485
          %v533 = vsel %vm419, %v362, %v487
          %v534 = vsel %vm419, %v366, %v489
          %v535 = vsel %vm419, %v370, %v491
          %v536 = vsel %vm419, %v374, %v493
          %v537 = vsel %vm419, %v378, %v495
          %v538 = vsel %vm419, %v382, %v497
          %v539 = vsel %vm419, %v386, %v499
          %v540 = vsel %vm419, %v390, %v501
          %v541 = vsel %vm419, %v394, %v503
          %v542 = vsel %vm419, %v398, %v505
          %v543 = vsel %vm419, %v402, %v507
          %v544 = vsel %vm419, %v406, %v509
          %v545 = vsel %vm419, %v410, %v511
          %v546 = vsel %vm419, %v414, %v513
          %v547 = vsel %vm419, %v418, %v515
          %v548 = vmul.f32 %v275, %v420
          %v549 = vmul.f32 %v276, %v532
          %v550 = vmul.f32 %v277, %v421
          %v551 = vmul.f32 %v278, %v533
          %v552 = vmul.f32 %v279, %v422
          %v553 = vmul.f32 %v280, %v534
          %v554 = vmul.f32 %v281, %v423
          %v555 = vmul.f32 %v282, %v535
          %v556 = vmul.f32 %v275, %v424
          %v557 = vmul.f32 %v276, %v536
          %v558 = vmul.f32 %v277, %v425
          %v559 = vmul.f32 %v278, %v537
          %v560 = vmul.f32 %v279, %v426
          %v561 = vmul.f32 %v280, %v538
          %v562 = vmul.f32 %v281, %v427
          %v563 = vmul.f32 %v282, %v539
          %v564 = vmul.f32 %v275, %v428
          %v565 = vmul.f32 %v276, %v540
          %v566 = vmul.f32 %v277, %v429
          %v567 = vmul.f32 %v278, %v541
          %v568 = vmul.f32 %v279, %v430
          %v569 = vmul.f32 %v280, %v542
          %v570 = vmul.f32 %v281, %v431
          %v571 = vmul.f32 %v282, %v543
          %v572 = vmul.f32 %v275, %v432
          %v573 = vmul.f32 %v276, %v544
          %v574 = vmul.f32 %v277, %v433
          %v575 = vmul.f32 %v278, %v545
          %v576 = vmul.f32 %v279, %v434
          %v577 = vmul.f32 %v280, %v546
          %v578 = vmul.f32 %v281, %v435
          %v579 = vmul.f32 %v282, %v547
          %v580 = vadd.f32 %v548, %v550
          %v581 = vadd.f32 %v580, %v552
          %v582 = vadd.f32 %v581, %v554
          %v583 = vrot.slane %v582, 4
          %v584 = vadd.f32 %v582, %v583
          %v585 = vrot.slane %v584, 2
          %v586 = vadd.f32 %v584, %v585
          %v587 = vrot.slane %v586, 1
          %v588 = vadd.f32 %v586, %v587
          %v589 = vadd.f32 %v549, %v551
          %v590 = vadd.f32 %v589, %v553
          %v591 = vadd.f32 %v590, %v555
          %v592 = vrot.slane %v591, 4
          %v593 = vadd.f32 %v591, %v592
          %v594 = vrot.slane %v593, 2
          %v595 = vadd.f32 %v593, %v594
          %v596 = vrot.slane %v595, 1
          %v597 = vadd.f32 %v595, %v596
          %v598 = vadd.f32 %v556, %v558
          %v599 = vadd.f32 %v598, %v560
          %v600 = vadd.f32 %v599, %v562
          %v601 = vrot.slane %v600, 4
          %v602 = vadd.f32 %v600, %v601
          %v603 = vrot.slane %v602, 2
          %v604 = vadd.f32 %v602, %v603
          %v605 = vrot.slane %v604, 1
          %v606 = vadd.f32 %v604, %v605
          %v607 = vadd.f32 %v557, %v559
          %v608 = vadd.f32 %v607, %v561
          %v609 = vadd.f32 %v608, %v563
          %v610 = vrot.slane %v609, 4
          %v611 = vadd.f32 %v609, %v610
          %v612 = vrot.slane %v611, 2
          %v613 = vadd.f32 %v611, %v612
          %v614 = vrot.slane %v613, 1
          %v615 = vadd.f32 %v613, %v614
          %v616 = vadd.f32 %v564, %v566
          %v617 = vadd.f32 %v616, %v568
          %v618 = vadd.f32 %v617, %v570
          %v619 = vrot.slane %v618, 4
          %v620 = vadd.f32 %v618, %v619
          %v621 = vrot.slane %v620, 2
          %v622 = vadd.f32 %v620, %v621
          %v623 = vrot.slane %v622, 1
          %v624 = vadd.f32 %v622, %v623
          %v625 = vadd.f32 %v565, %v567
          %v626 = vadd.f32 %v625, %v569
          %v627 = vadd.f32 %v626, %v571
          %v628 = vrot.slane %v627, 4
          %v629 = vadd.f32 %v627, %v628
          %v630 = vrot.slane %v629, 2
          %v631 = vadd.f32 %v629, %v630
          %v632 = vrot.slane %v631, 1
          %v633 = vadd.f32 %v631, %v632
          %v634 = vadd.f32 %v572, %v574
          %v635 = vadd.f32 %v634, %v576
          %v636 = vadd.f32 %v635, %v578
          %v637 = vrot.slane %v636, 4
          %v638 = vadd.f32 %v636, %v637
          %v639 = vrot.slane %v638, 2
          %v640 = vadd.f32 %v638, %v639
          %v641 = vrot.slane %v640, 1
          %v642 = vadd.f32 %v640, %v641
          %v643 = vadd.f32 %v573, %v575
          %v644 = vadd.f32 %v643, %v577
          %v645 = vadd.f32 %v644, %v579
          %v646 = vrot.slane %v645, 4
          %v647 = vadd.f32 %v645, %v646
          %v648 = vrot.slane %v647, 2
          %v649 = vadd.f32 %v647, %v648
          %v650 = vrot.slane %v649, 1
          %v651 = vadd.f32 %v649, %v650
          %v652 = vmax.f32 %v588, %v624
          %v653 = vmax.f32 %v606, %v642
          %v654 = vmax.f32 %v652, %v653
          %v655 = vmax.f32 %v597, %v633
          %v656 = vmax.f32 %v615, %v651
          %v657 = vmax.f32 %v655, %v656
          %v658 = vsub.f32 %v588, %v654
          %v659 = vsub.f32 %v597, %v657
          %v660 = vsub.f32 %v606, %v654
          %v661 = vsub.f32 %v615, %v657
          %v662 = vsub.f32 %v624, %v654
          %v663 = vsub.f32 %v633, %v657
          %v664 = vsub.f32 %v642, %v654
          %v665 = vsub.f32 %v651, %v657
          %v666 = vmul.f32 %v658, 1.442695
          %v667 = vpow.pop %v666
          %v668 = vmul.f32 %v659, 1.442695
          %v669 = vpow.pop %v668
          %v670 = vmul.f32 %v660, 1.442695
          %v671 = vpow.pop %v670
          %v672 = vmul.f32 %v661, 1.442695
          %v673 = vpow.pop %v672
          %v674 = vmul.f32 %v662, 1.442695
          %v675 = vpow.pop %v674
          %v676 = vmul.f32 %v663, 1.442695
          %v677 = vpow.pop %v676
          %v678 = vmul.f32 %v664, 1.442695
          %v679 = vpow.pop %v678
          %v680 = vmul.f32 %v665, 1.442695
          %v681 = vpow.pop %v680
          %v690 = vrot.slane %v671, 7
          %vm691 = vcmask 1041409
          %v692 = vsel %vm691, %v690, %v667
          %v693 = vrot.slane %v675, 6
          %vm694 = vcmask 1042434
          %v695 = vsel %vm694, %v693, %v692
          %v696 = vrot.slane %v679, 5
          %vm697 = vcmask 1043459
          %v698 = vsel %vm697, %v696, %v695
          %v699 = vrot.slane %v673, 7
          %v700 = vsel %vm691, %v699, %v669
          %v701 = vrot.slane %v677, 6
          %v702 = vsel %vm694, %v701, %v700
          %v703 = vrot.slane %v681, 5
          %v704 = vsel %vm697, %v703, %v702
          %vm707 = vcmask 1043456
          %v708 = vsel %vm707, %v698, 0.0
          %v709 = vrot.slane %v708, 4
          %v710 = vadd.f32 %v708, %v709
          %v711 = vrot.slane %v710, 2
          %v712 = vadd.f32 %v710, %v711
          %v713 = vrot.slane %v712, 1
          %v714 = vadd.f32 %v712, %v713
          %v715 = vsel %vm707, %v704, 0.0
          %v716 = vrot.slane %v715, 4
          %v717 = vadd.f32 %v715, %v716
          %v718 = vrot.slane %v717, 2
          %v719 = vadd.f32 %v717, %v718
          %v720 = vrot.slane %v719, 1
          %v721 = vadd.f32 %v719, %v720
          %v722 = vlog2.pop %v714
          %v723 = vmul.f32 %v722, 0.6931472
          %v724 = vlog2.pop %v721
          %v725 = vmul.f32 %v724, 0.6931472
          %v726 = vadd.f32 %v723, %v654
          %v727 = vadd.f32 %v725, %v657
          %v728 = vsub.f32 %v726, %v588
          %v729 = vsub.f32 %v727, %v597
          %v730 = vadd.f32 %v728, 0.0
          %v731 = vadd.f32 %v729, 0.0
          %v732 = vmul.f32 %v283, %v420
          %v733 = vmul.f32 %v284, %v532
          %v734 = vmul.f32 %v285, %v421
          %v735 = vmul.f32 %v286, %v533
          %v736 = vmul.f32 %v287, %v422
          %v737 = vmul.f32 %v288, %v534
          %v738 = vmul.f32 %v289, %v423
          %v739 = vmul.f32 %v290, %v535
          %v740 = vmul.f32 %v283, %v424
          %v741 = vmul.f32 %v284, %v536
          %v742 = vmul.f32 %v285, %v425
          %v743 = vmul.f32 %v286, %v537
          %v744 = vmul.f32 %v287, %v426
          %v745 = vmul.f32 %v288, %v538
          %v746 = vmul.f32 %v289, %v427
          %v747 = vmul.f32 %v290, %v539
          %v748 = vmul.f32 %v283, %v428
          %v749 = vmul.f32 %v284, %v540
          %v750 = vmul.f32 %v285, %v429
          %v751 = vmul.f32 %v286, %v541
          %v752 = vmul.f32 %v287, %v430
          %v753 = vmul.f32 %v288, %v542
          %v754 = vmul.f32 %v289, %v431
          %v755 = vmul.f32 %v290, %v543
          %v756 = vmul.f32 %v283, %v432
          %v757 = vmul.f32 %v284, %v544
          %v758 = vmul.f32 %v285, %v433
          %v759 = vmul.f32 %v286, %v545
          %v760 = vmul.f32 %v287, %v434
          %v761 = vmul.f32 %v288, %v546
          %v762 = vmul.f32 %v289, %v435
          %v763 = vmul.f32 %v290, %v547
          %v764 = vadd.f32 %v732, %v734
          %v765 = vadd.f32 %v764, %v736
          %v766 = vadd.f32 %v765, %v738
          %v767 = vrot.slane %v766, 4
          %v768 = vadd.f32 %v766, %v767
          %v769 = vrot.slane %v768, 2
          %v770 = vadd.f32 %v768, %v769
          %v771 = vrot.slane %v770, 1
          %v772 = vadd.f32 %v770, %v771
          %v773 = vadd.f32 %v733, %v735
          %v774 = vadd.f32 %v773, %v737
          %v775 = vadd.f32 %v774, %v739
          %v776 = vrot.slane %v775, 4
          %v777 = vadd.f32 %v775, %v776
          %v778 = vrot.slane %v777, 2
          %v779 = vadd.f32 %v777, %v778
          %v780 = vrot.slane %v779, 1
          %v781 = vadd.f32 %v779, %v780
          %v782 = vadd.f32 %v740, %v742
          %v783 = vadd.f32 %v782, %v744
          %v784 = vadd.f32 %v783, %v746
          %v785 = vrot.slane %v784, 4
          %v786 = vadd.f32 %v784, %v785
          %v787 = vrot.slane %v786, 2
          %v788 = vadd.f32 %v786, %v787
          %v789 = vrot.slane %v788, 1
          %v790 = vadd.f32 %v788, %v789
          %v791 = vadd.f32 %v741, %v743
          %v792 = vadd.f32 %v791, %v745
          %v793 = vadd.f32 %v792, %v747
          %v794 = vrot.slane %v793, 4
          %v795 = vadd.f32 %v793, %v794
          %v796 = vrot.slane %v795, 2
          %v797 = vadd.f32 %v795, %v796
          %v798 = vrot.slane %v797, 1
          %v799 = vadd.f32 %v797, %v798
          %v800 = vadd.f32 %v748, %v750
          %v801 = vadd.f32 %v800, %v752
          %v802 = vadd.f32 %v801, %v754
          %v803 = vrot.slane %v802, 4
          %v804 = vadd.f32 %v802, %v803
          %v805 = vrot.slane %v804, 2
          %v806 = vadd.f32 %v804, %v805
          %v807 = vrot.slane %v806, 1
          %v808 = vadd.f32 %v806, %v807
          %v809 = vadd.f32 %v749, %v751
          %v810 = vadd.f32 %v809, %v753
          %v811 = vadd.f32 %v810, %v755
          %v812 = vrot.slane %v811, 4
          %v813 = vadd.f32 %v811, %v812
          %v814 = vrot.slane %v813, 2
          %v815 = vadd.f32 %v813, %v814
          %v816 = vrot.slane %v815, 1
          %v817 = vadd.f32 %v815, %v816
          %v818 = vadd.f32 %v756, %v758
          %v819 = vadd.f32 %v818, %v760
          %v820 = vadd.f32 %v819, %v762
          %v821 = vrot.slane %v820, 4
          %v822 = vadd.f32 %v820, %v821
          %v823 = vrot.slane %v822, 2
          %v824 = vadd.f32 %v822, %v823
          %v825 = vrot.slane %v824, 1
          %v826 = vadd.f32 %v824, %v825
          %v827 = vadd.f32 %v757, %v759
          %v828 = vadd.f32 %v827, %v761
          %v829 = vadd.f32 %v828, %v763
          %v830 = vrot.slane %v829, 4
          %v831 = vadd.f32 %v829, %v830
          %v832 = vrot.slane %v831, 2
          %v833 = vadd.f32 %v831, %v832
          %v834 = vrot.slane %v833, 1
          %v835 = vadd.f32 %v833, %v834
          %v836 = vmax.f32 %v772, %v808
          %v837 = vmax.f32 %v790, %v826
          %v838 = vmax.f32 %v836, %v837
          %v839 = vmax.f32 %v781, %v817
          %v840 = vmax.f32 %v799, %v835
          %v841 = vmax.f32 %v839, %v840
          %v842 = vsub.f32 %v772, %v838
          %v843 = vsub.f32 %v781, %v841
          %v844 = vsub.f32 %v790, %v838
          %v845 = vsub.f32 %v799, %v841
          %v846 = vsub.f32 %v808, %v838
          %v847 = vsub.f32 %v817, %v841
          %v848 = vsub.f32 %v826, %v838
          %v849 = vsub.f32 %v835, %v841
          %v850 = vmul.f32 %v842, 1.442695
          %v851 = vpow.pop %v850
          %v852 = vmul.f32 %v843, 1.442695
          %v853 = vpow.pop %v852
          %v854 = vmul.f32 %v844, 1.442695
          %v855 = vpow.pop %v854
          %v856 = vmul.f32 %v845, 1.442695
          %v857 = vpow.pop %v856
          %v858 = vmul.f32 %v846, 1.442695
          %v859 = vpow.pop %v858
          %v860 = vmul.f32 %v847, 1.442695
          %v861 = vpow.pop %v860
          %v862 = vmul.f32 %v848, 1.442695
          %v863 = vpow.pop %v862
          %v864 = vmul.f32 %v849, 1.442695
          %v865 = vpow.pop %v864
          %v874 = vrot.slane %v855, 7
          %v875 = vsel %vm691, %v874, %v851
          %v876 = vrot.slane %v859, 6
          %v877 = vsel %vm694, %v876, %v875
          %v878 = vrot.slane %v863, 5
          %v879 = vsel %vm697, %v878, %v877
          %v880 = vrot.slane %v857, 7
          %v881 = vsel %vm691, %v880, %v853
          %v882 = vrot.slane %v861, 6
          %v883 = vsel %vm694, %v882, %v881
          %v884 = vrot.slane %v865, 5
          %v885 = vsel %vm697, %v884, %v883
          %v888 = vsel %vm707, %v879, 0.0
          %v889 = vrot.slane %v888, 4
          %v890 = vadd.f32 %v888, %v889
          %v891 = vrot.slane %v890, 2
          %v892 = vadd.f32 %v890, %v891
          %v893 = vrot.slane %v892, 1
          %v894 = vadd.f32 %v892, %v893
          %v895 = vsel %vm707, %v885, 0.0
          %v896 = vrot.slane %v895, 4
          %v897 = vadd.f32 %v895, %v896
          %v898 = vrot.slane %v897, 2
          %v899 = vadd.f32 %v897, %v898
          %v900 = vrot.slane %v899, 1
          %v901 = vadd.f32 %v899, %v900
          %v902 = vlog2.pop %v894
          %v903 = vmul.f32 %v902, 0.6931472
          %v904 = vlog2.pop %v901
          %v905 = vmul.f32 %v904, 0.6931472
          %v906 = vadd.f32 %v903, %v838
          %v907 = vadd.f32 %v905, %v841
          %v908 = vsub.f32 %v906, %v790
          %v909 = vsub.f32 %v907, %v799
          %v910 = vadd.f32 %v730, %v908
          %v911 = vadd.f32 %v731, %v909
          %v912 = vmul.f32 %v291, %v420
          %v913 = vmul.f32 %v292, %v532
          %v914 = vmul.f32 %v293, %v421
          %v915 = vmul.f32 %v294, %v533
          %v916 = vmul.f32 %v295, %v422
          %v917 = vmul.f32 %v296, %v534
          %v918 = vmul.f32 %v297, %v423
          %v919 = vmul.f32 %v298, %v535
          %v920 = vmul.f32 %v291, %v424
          %v921 = vmul.f32 %v292, %v536
          %v922 = vmul.f32 %v293, %v425
          %v923 = vmul.f32 %v294, %v537
          %v924 = vmul.f32 %v295, %v426
          %v925 = vmul.f32 %v296, %v538
          %v926 = vmul.f32 %v297, %v427
          %v927 = vmul.f32 %v298, %v539
          %v928 = vmul.f32 %v291, %v428
          %v929 = vmul.f32 %v292, %v540
          %v930 = vmul.f32 %v293, %v429
          %v931 = vmul.f32 %v294, %v541
          %v932 = vmul.f32 %v295, %v430
          %v933 = vmul.f32 %v296, %v542
          %v934 = vmul.f32 %v297, %v431
          %v935 = vmul.f32 %v298, %v543
          %v936 = vmul.f32 %v291, %v432
          %v937 = vmul.f32 %v292, %v544
          %v938 = vmul.f32 %v293, %v433
          %v939 = vmul.f32 %v294, %v545
          %v940 = vmul.f32 %v295, %v434
          %v941 = vmul.f32 %v296, %v546
          %v942 = vmul.f32 %v297, %v435
          %v943 = vmul.f32 %v298, %v547
          %v944 = vadd.f32 %v912, %v914
          %v945 = vadd.f32 %v944, %v916
          %v946 = vadd.f32 %v945, %v918
          %v947 = vrot.slane %v946, 4
          %v948 = vadd.f32 %v946, %v947
          %v949 = vrot.slane %v948, 2
          %v950 = vadd.f32 %v948, %v949
          %v951 = vrot.slane %v950, 1
          %v952 = vadd.f32 %v950, %v951
          %v953 = vadd.f32 %v913, %v915
          %v954 = vadd.f32 %v953, %v917
          %v955 = vadd.f32 %v954, %v919
          %v956 = vrot.slane %v955, 4
          %v957 = vadd.f32 %v955, %v956
          %v958 = vrot.slane %v957, 2
          %v959 = vadd.f32 %v957, %v958
          %v960 = vrot.slane %v959, 1
          %v961 = vadd.f32 %v959, %v960
          %v962 = vadd.f32 %v920, %v922
          %v963 = vadd.f32 %v962, %v924
          %v964 = vadd.f32 %v963, %v926
          %v965 = vrot.slane %v964, 4
          %v966 = vadd.f32 %v964, %v965
          %v967 = vrot.slane %v966, 2
          %v968 = vadd.f32 %v966, %v967
          %v969 = vrot.slane %v968, 1
          %v970 = vadd.f32 %v968, %v969
          %v971 = vadd.f32 %v921, %v923
          %v972 = vadd.f32 %v971, %v925
          %v973 = vadd.f32 %v972, %v927
          %v974 = vrot.slane %v973, 4
          %v975 = vadd.f32 %v973, %v974
          %v976 = vrot.slane %v975, 2
          %v977 = vadd.f32 %v975, %v976
          %v978 = vrot.slane %v977, 1
          %v979 = vadd.f32 %v977, %v978
          %v980 = vadd.f32 %v928, %v930
          %v981 = vadd.f32 %v980, %v932
          %v982 = vadd.f32 %v981, %v934
          %v983 = vrot.slane %v982, 4
          %v984 = vadd.f32 %v982, %v983
          %v985 = vrot.slane %v984, 2
          %v986 = vadd.f32 %v984, %v985
          %v987 = vrot.slane %v986, 1
          %v988 = vadd.f32 %v986, %v987
          %v989 = vadd.f32 %v929, %v931
          %v990 = vadd.f32 %v989, %v933
          %v991 = vadd.f32 %v990, %v935
          %v992 = vrot.slane %v991, 4
          %v993 = vadd.f32 %v991, %v992
          %v994 = vrot.slane %v993, 2
          %v995 = vadd.f32 %v993, %v994
          %v996 = vrot.slane %v995, 1
          %v997 = vadd.f32 %v995, %v996
          %v998 = vadd.f32 %v936, %v938
          %v999 = vadd.f32 %v998, %v940
          %v1000 = vadd.f32 %v999, %v942
          %v1001 = vrot.slane %v1000, 4
          %v1002 = vadd.f32 %v1000, %v1001
          %v1003 = vrot.slane %v1002, 2
          %v1004 = vadd.f32 %v1002, %v1003
          %v1005 = vrot.slane %v1004, 1
          %v1006 = vadd.f32 %v1004, %v1005
          %v1007 = vadd.f32 %v937, %v939
          %v1008 = vadd.f32 %v1007, %v941
          %v1009 = vadd.f32 %v1008, %v943
          %v1010 = vrot.slane %v1009, 4
          %v1011 = vadd.f32 %v1009, %v1010
          %v1012 = vrot.slane %v1011, 2
          %v1013 = vadd.f32 %v1011, %v1012
          %v1014 = vrot.slane %v1013, 1
          %v1015 = vadd.f32 %v1013, %v1014
          %v1016 = vmax.f32 %v952, %v988
          %v1017 = vmax.f32 %v970, %v1006
          %v1018 = vmax.f32 %v1016, %v1017
          %v1019 = vmax.f32 %v961, %v997
          %v1020 = vmax.f32 %v979, %v1015
          %v1021 = vmax.f32 %v1019, %v1020
          %v1022 = vsub.f32 %v952, %v1018
          %v1023 = vsub.f32 %v961, %v1021
          %v1024 = vsub.f32 %v970, %v1018
          %v1025 = vsub.f32 %v979, %v1021
          %v1026 = vsub.f32 %v988, %v1018
          %v1027 = vsub.f32 %v997, %v1021
          %v1028 = vsub.f32 %v1006, %v1018
          %v1029 = vsub.f32 %v1015, %v1021
          %v1030 = vmul.f32 %v1022, 1.442695
          %v1031 = vpow.pop %v1030
          %v1032 = vmul.f32 %v1023, 1.442695
          %v1033 = vpow.pop %v1032
          %v1034 = vmul.f32 %v1024, 1.442695
          %v1035 = vpow.pop %v1034
          %v1036 = vmul.f32 %v1025, 1.442695
          %v1037 = vpow.pop %v1036
          %v1038 = vmul.f32 %v1026, 1.442695
          %v1039 = vpow.pop %v1038
          %v1040 = vmul.f32 %v1027, 1.442695
          %v1041 = vpow.pop %v1040
          %v1042 = vmul.f32 %v1028, 1.442695
          %v1043 = vpow.pop %v1042
          %v1044 = vmul.f32 %v1029, 1.442695
          %v1045 = vpow.pop %v1044
          %v1054 = vrot.slane %v1035, 7
          %v1055 = vsel %vm691, %v1054, %v1031
          %v1056 = vrot.slane %v1039, 6
          %v1057 = vsel %vm694, %v1056, %v1055
          %v1058 = vrot.slane %v1043, 5
          %v1059 = vsel %vm697, %v1058, %v1057
          %v1060 = vrot.slane %v1037, 7
          %v1061 = vsel %vm691, %v1060, %v1033
          %v1062 = vrot.slane %v1041, 6
          %v1063 = vsel %vm694, %v1062, %v1061
          %v1064 = vrot.slane %v1045, 5
          %v1065 = vsel %vm697, %v1064, %v1063
          %v1068 = vsel %vm707, %v1059, 0.0
          %v1069 = vrot.slane %v1068, 4
          %v1070 = vadd.f32 %v1068, %v1069
          %v1071 = vrot.slane %v1070, 2
          %v1072 = vadd.f32 %v1070, %v1071
          %v1073 = vrot.slane %v1072, 1
          %v1074 = vadd.f32 %v1072, %v1073
          %v1075 = vsel %vm707, %v1065, 0.0
          %v1076 = vrot.slane %v1075, 4
          %v1077 = vadd.f32 %v1075, %v1076
          %v1078 = vrot.slane %v1077, 2
          %v1079 = vadd.f32 %v1077, %v1078
          %v1080 = vrot.slane %v1079, 1
          %v1081 = vadd.f32 %v1079, %v1080
          %v1082 = vlog2.pop %v1074
          %v1083 = vmul.f32 %v1082, 0.6931472
          %v1084 = vlog2.pop %v1081
          %v1085 = vmul.f32 %v1084, 0.6931472
          %v1086 = vadd.f32 %v1083, %v1018
          %v1087 = vadd.f32 %v1085, %v1021
          %v1088 = vsub.f32 %v1086, %v988
          %v1089 = vsub.f32 %v1087, %v997
          %v1090 = vadd.f32 %v910, %v1088
          %v1091 = vadd.f32 %v911, %v1089
          %v1092 = vmul.f32 %v299, %v420
          %v1093 = vmul.f32 %v300, %v532
          %v1094 = vmul.f32 %v301, %v421
          %v1095 = vmul.f32 %v302, %v533
          %v1096 = vmul.f32 %v303, %v422
          %v1097 = vmul.f32 %v304, %v534
          %v1098 = vmul.f32 %v305, %v423
          %v1099 = vmul.f32 %v306, %v535
          %v1100 = vmul.f32 %v299, %v424
          %v1101 = vmul.f32 %v300, %v536
          %v1102 = vmul.f32 %v301, %v425
          %v1103 = vmul.f32 %v302, %v537
          %v1104 = vmul.f32 %v303, %v426
          %v1105 = vmul.f32 %v304, %v538
          %v1106 = vmul.f32 %v305, %v427
          %v1107 = vmul.f32 %v306, %v539
          %v1108 = vmul.f32 %v299, %v428
          %v1109 = vmul.f32 %v300, %v540
          %v1110 = vmul.f32 %v301, %v429
          %v1111 = vmul.f32 %v302, %v541
          %v1112 = vmul.f32 %v303, %v430
          %v1113 = vmul.f32 %v304, %v542
          %v1114 = vmul.f32 %v305, %v431
          %v1115 = vmul.f32 %v306, %v543
          %v1116 = vmul.f32 %v299, %v432
          %v1117 = vmul.f32 %v300, %v544
          %v1118 = vmul.f32 %v301, %v433
          %v1119 = vmul.f32 %v302, %v545
          %v1120 = vmul.f32 %v303, %v434
          %v1121 = vmul.f32 %v304, %v546
          %v1122 = vmul.f32 %v305, %v435
          %v1123 = vmul.f32 %v306, %v547
          %v1124 = vadd.f32 %v1092, %v1094
          %v1125 = vadd.f32 %v1124, %v1096
          %v1126 = vadd.f32 %v1125, %v1098
          %v1127 = vrot.slane %v1126, 4
          %v1128 = vadd.f32 %v1126, %v1127
          %v1129 = vrot.slane %v1128, 2
          %v1130 = vadd.f32 %v1128, %v1129
          %v1131 = vrot.slane %v1130, 1
          %v1132 = vadd.f32 %v1130, %v1131
          %v1133 = vadd.f32 %v1093, %v1095
          %v1134 = vadd.f32 %v1133, %v1097
          %v1135 = vadd.f32 %v1134, %v1099
          %v1136 = vrot.slane %v1135, 4
          %v1137 = vadd.f32 %v1135, %v1136
          %v1138 = vrot.slane %v1137, 2
          %v1139 = vadd.f32 %v1137, %v1138
          %v1140 = vrot.slane %v1139, 1
          %v1141 = vadd.f32 %v1139, %v1140
          %v1142 = vadd.f32 %v1100, %v1102
          %v1143 = vadd.f32 %v1142, %v1104
          %v1144 = vadd.f32 %v1143, %v1106
          %v1145 = vrot.slane %v1144, 4
          %v1146 = vadd.f32 %v1144, %v1145
          %v1147 = vrot.slane %v1146, 2
          %v1148 = vadd.f32 %v1146, %v1147
          %v1149 = vrot.slane %v1148, 1
          %v1150 = vadd.f32 %v1148, %v1149
          %v1151 = vadd.f32 %v1101, %v1103
          %v1152 = vadd.f32 %v1151, %v1105
          %v1153 = vadd.f32 %v1152, %v1107
          %v1154 = vrot.slane %v1153, 4
          %v1155 = vadd.f32 %v1153, %v1154
          %v1156 = vrot.slane %v1155, 2
          %v1157 = vadd.f32 %v1155, %v1156
          %v1158 = vrot.slane %v1157, 1
          %v1159 = vadd.f32 %v1157, %v1158
          %v1160 = vadd.f32 %v1108, %v1110
          %v1161 = vadd.f32 %v1160, %v1112
          %v1162 = vadd.f32 %v1161, %v1114
          %v1163 = vrot.slane %v1162, 4
          %v1164 = vadd.f32 %v1162, %v1163
          %v1165 = vrot.slane %v1164, 2
          %v1166 = vadd.f32 %v1164, %v1165
          %v1167 = vrot.slane %v1166, 1
          %v1168 = vadd.f32 %v1166, %v1167
          %v1169 = vadd.f32 %v1109, %v1111
          %v1170 = vadd.f32 %v1169, %v1113
          %v1171 = vadd.f32 %v1170, %v1115
          %v1172 = vrot.slane %v1171, 4
          %v1173 = vadd.f32 %v1171, %v1172
          %v1174 = vrot.slane %v1173, 2
          %v1175 = vadd.f32 %v1173, %v1174
          %v1176 = vrot.slane %v1175, 1
          %v1177 = vadd.f32 %v1175, %v1176
          %v1178 = vadd.f32 %v1116, %v1118
          %v1179 = vadd.f32 %v1178, %v1120
          %v1180 = vadd.f32 %v1179, %v1122
          %v1181 = vrot.slane %v1180, 4
          %v1182 = vadd.f32 %v1180, %v1181
          %v1183 = vrot.slane %v1182, 2
          %v1184 = vadd.f32 %v1182, %v1183
          %v1185 = vrot.slane %v1184, 1
          %v1186 = vadd.f32 %v1184, %v1185
          %v1187 = vadd.f32 %v1117, %v1119
          %v1188 = vadd.f32 %v1187, %v1121
          %v1189 = vadd.f32 %v1188, %v1123
          %v1190 = vrot.slane %v1189, 4
          %v1191 = vadd.f32 %v1189, %v1190
          %v1192 = vrot.slane %v1191, 2
          %v1193 = vadd.f32 %v1191, %v1192
          %v1194 = vrot.slane %v1193, 1
          %v1195 = vadd.f32 %v1193, %v1194
          %v1196 = vmax.f32 %v1132, %v1168
          %v1197 = vmax.f32 %v1150, %v1186
          %v1198 = vmax.f32 %v1196, %v1197
          %v1199 = vmax.f32 %v1141, %v1177
          %v1200 = vmax.f32 %v1159, %v1195
          %v1201 = vmax.f32 %v1199, %v1200
          %v1202 = vsub.f32 %v1132, %v1198
          %v1203 = vsub.f32 %v1141, %v1201
          %v1204 = vsub.f32 %v1150, %v1198
          %v1205 = vsub.f32 %v1159, %v1201
          %v1206 = vsub.f32 %v1168, %v1198
          %v1207 = vsub.f32 %v1177, %v1201
          %v1208 = vsub.f32 %v1186, %v1198
          %v1209 = vsub.f32 %v1195, %v1201
          %v1210 = vmul.f32 %v1202, 1.442695
          %v1211 = vpow.pop %v1210
          %v1212 = vmul.f32 %v1203, 1.442695
          %v1213 = vpow.pop %v1212
          %v1214 = vmul.f32 %v1204, 1.442695
          %v1215 = vpow.pop %v1214
          %v1216 = vmul.f32 %v1205, 1.442695
          %v1217 = vpow.pop %v1216
          %v1218 = vmul.f32 %v1206, 1.442695
          %v1219 = vpow.pop %v1218
          %v1220 = vmul.f32 %v1207, 1.442695
          %v1221 = vpow.pop %v1220
          %v1222 = vmul.f32 %v1208, 1.442695
          %v1223 = vpow.pop %v1222
          %v1224 = vmul.f32 %v1209, 1.442695
          %v1225 = vpow.pop %v1224
          %v1234 = vrot.slane %v1215, 7
          %v1235 = vsel %vm691, %v1234, %v1211
          %v1236 = vrot.slane %v1219, 6
          %v1237 = vsel %vm694, %v1236, %v1235
          %v1238 = vrot.slane %v1223, 5
          %v1239 = vsel %vm697, %v1238, %v1237
          %v1240 = vrot.slane %v1217, 7
          %v1241 = vsel %vm691, %v1240, %v1213
          %v1242 = vrot.slane %v1221, 6
          %v1243 = vsel %vm694, %v1242, %v1241
          %v1244 = vrot.slane %v1225, 5
          %v1245 = vsel %vm697, %v1244, %v1243
          %v1248 = vsel %vm707, %v1239, 0.0
          %v1249 = vrot.slane %v1248, 4
          %v1250 = vadd.f32 %v1248, %v1249
          %v1251 = vrot.slane %v1250, 2
          %v1252 = vadd.f32 %v1250, %v1251
          %v1253 = vrot.slane %v1252, 1
          %v1254 = vadd.f32 %v1252, %v1253
          %v1255 = vsel %vm707, %v1245, 0.0
          %v1256 = vrot.slane %v1255, 4
          %v1257 = vadd.f32 %v1255, %v1256
          %v1258 = vrot.slane %v1257, 2
          %v1259 = vadd.f32 %v1257, %v1258
          %v1260 = vrot.slane %v1259, 1
          %v1261 = vadd.f32 %v1259, %v1260
          %v1262 = vlog2.pop %v1254
          %v1263 = vmul.f32 %v1262, 0.6931472
          %v1264 = vlog2.pop %v1261
          %v1265 = vmul.f32 %v1264, 0.6931472
          %v1266 = vadd.f32 %v1263, %v1198
          %v1267 = vadd.f32 %v1265, %v1201
          %v1268 = vsub.f32 %v1266, %v1186
          %v1269 = vsub.f32 %v1267, %v1195
          %v1270 = vadd.f32 %v1090, %v1268
          %v1271 = vadd.f32 %v1091, %v1269
          %v1272 = vld [vmem:[%s263] sm:$0x1]
          %vm1273 = vcmask 1040384
          %v1274 = vsel %vm1273, %v1270, 0.0
          %v1275 = vsel %vm1273, %v1271, 0.0
          %v1276 = vadd.f32 %v1274, %v1275
          %1277 = vadd.xlane.f32.xlu0 %v1276
          %v1278 = vpop.xlane.xlu0 %1277
          %v1279 = vrot.slane %v1278, 4
          %v1280 = vadd.f32 %v1278, %v1279
          %v1281 = vrot.slane %v1280, 2
          %v1282 = vadd.f32 %v1280, %v1281
          %v1283 = vrot.slane %v1282, 1
          %v1284 = vadd.f32 %v1282, %v1283
          %s1285 = vtos %v1284
          %v1286 = vstv %s1285
          %v1287 = vadd.f32 %v1272, %v1286
          %vm1288 = vcmask 0
          %1289 = vst.msk [vmem:[%s263] sm:$0x1] %vm1288, %v1287
        $region44: #{tpu_custom_call.1} parent=27 // pred_fallthru
          _
        %p1290 = scmp.lt.s32.totalorder %s23, 1
        %s1291 = scalar_select %p1290, %s23, 1
        %s1292 = scalar_lea.vmem %s2, %s1291
        // Predicated region
        $region45: #{tpu_custom_call.1} parent=27 // pred_check
          %p1293 = pneg %p115
        $region46: #{tpu_custom_call.1} parent=27 // pred_check_branch
          %1295 = sbr.rel (%p1293) target = $region48
        $region47: #{tpu_custom_call.1} parent=27 // pred_region
          _
        $region48: #{tpu_custom_call.1} parent=27 // pred_fallthru
          _
      $region28: #{tpu_custom_call.1} parent=5 // pred_fallthru
        _
      %p1296 = scmp.le.s32.totalorder 2, %s14
      // Predicated region
      $region49: #{tpu_custom_call.1} parent=5 // pred_check
        %p1297 = pneg %p1296
      $region50: #{tpu_custom_call.1} parent=5 // pred_check_branch
        %1299 = sbr.rel (%p1297) target = $region52
      $region51: #{tpu_custom_call.1} parent=5 // pred_region
        %s1300 = ssub.s32 %s14, 2
        // Predicated region
        $region53: #{tpu_custom_call.1} parent=51 // pred_check
          %p1301 = pneg %p121
        $region54: #{tpu_custom_call.1} parent=51 // pred_check_branch
          %1303 = sbr.rel (%p1301) target = $region56
        $region55: #{tpu_custom_call.1} parent=51 // pred_region
          %p1304 = scmp.lt.s32.totalorder %s25, 1
          %s1305 = scalar_select %p1304, %s25, 1
          %s1306 = scalar_lea.vmem %s2, %s1305
        $region56: #{tpu_custom_call.1} parent=51 // pred_fallthru
          _
      $region52: #{tpu_custom_call.1} parent=5 // pred_fallthru
        _
    $region6: #{tpu_custom_call.1} parent=1 // loop_footer
      %s18 = sadd.s32 1, %s14
    $region7: #{tpu_custom_call.1} parent=1 // loop_footer_branch
      %13 = sbr.rel target = $region3
    $region8: #{tpu_custom_call.1} parent=1 // loop_exit
      _
    %1307 = vsyncpa [#allocation3], 1
    %s1308 = scalar_lea.sflag [#allocation3], 1
    %1309 = vsyncpa %s1308, 1
    %1310 = vsyncpa [#allocation5], 1
    %s1311 = scalar_lea.sflag [#allocation5], 1
    %1312 = vsyncpa %s1311, 1

</llo_original>
